<compile_context>
chip_gen: v7x
topology: tpu7x:2x2x1
jax: 0.10.0
libtpu: 0.0.40
codegen_flags: <defaults>
</compile_context>

<pallas_src>
import numpy as np
import jax
import jax.numpy as jnp
from jax import lax
from jax.experimental import pallas as pl
from jax.experimental.pallas import tpu as pltpu

# ---- DenseGrid config (synthetic, matches the module __init__ semantics) ----
BASE_LOD = 2
NUM_LOD = 3
GRID_DIM = 3            # 3-D points
FEAT_DIM = 1
# TODO(synk): the 'trilinear' branch calls an undefined trilinear_interpolation
# helper in the source module; only the 'closest' branch is implemented.

LODS = [2 ** L for L in range(BASE_LOD, BASE_LOD + NUM_LOD)]      # [4, 8, 16]
SIZES = [r ** GRID_DIM for r in LODS]                             # [64, 512, 4096]
OFFSETS = np.concatenate([[0], np.cumsum(SIZES)[:-1]]).tolist()   # [0, 64, 576]
K_TOTAL = int(sum(SIZES))                                         # 4672

ROW = 128                                                         # codebook row width (lanes)
N_ROWS = ((K_TOTAL + ROW - 1) // ROW + 7) // 8 * 8                # 37 -> 40 (sublane-aligned)
K_PAD = N_ROWS * ROW                                              # 5120
TN = 256                 # points per grid step (lane-dense; multiple of 128)


# Layout: points enter as (3, TN) (coords on sublanes, points on lanes); the
# padded, concatenated codebook enters as (N_ROWS, 128).  Output is produced
# lane-dense as (1, TN) and transposed to (N, 1) in the wrapper.
def dense_grid_kernel(pts_ref, cb_ref, out_ref):
    p = pts_ref[...] * 0.5 + 0.5                  # (3, TN) f32, normalized to [0, 1)
    cb = cb_ref[...]                              # (N_ROWS, 128) f32, all LOD tables
    # Hoisted iotas (JAX does not CSE broadcast_in_dim; build once, reuse per LOD).
    lane_iota = lax.broadcasted_iota(jnp.int32, (ROW, TN), 0)      # (128, TN)
    row_iota = lax.broadcasted_iota(jnp.int32, (N_ROWS, TN), 0)    # (N_ROWS, TN)
    acc = jnp.zeros((1, TN), jnp.float32)
    for res, off in zip(LODS, OFFSETS):           # static (unrolled) loop over LODs
        x = jnp.floor(p[0:1, :] * (res - 1)).astype(jnp.int32)     # (1, TN)
        y = jnp.floor(p[1:2, :] * (res - 1)).astype(jnp.int32)
        z = jnp.floor(p[2:3, :] * (res - 1)).astype(jnp.int32)
        idx = x + y * res + z * (res * res) + off                  # (1, TN) global idx
        idx = jnp.clip(idx, 0, K_TOTAL - 1)       # match jnp.take clamp semantics
        hi = idx >> 7                             # codebook row     (1, TN)
        lo = idx & 127                            # lane within row  (1, TN)
        # Two-level gather:
        #  1) fetch column lo[n] of every row via a 128-wide lane one-hot (MXU):
        #     cols[r, n] = cb[r, lo[n]]
        onehot_lo = (lane_iota == lo).astype(jnp.float32)          # (128, TN)
        cols = jnp.dot(cb, onehot_lo, preferred_element_type=jnp.float32)  # (N_ROWS, TN)
        #  2) pick the correct row with a sublane select + reduce (XLU slot).
        sel = (row_iota == hi).astype(jnp.float32)                 # (N_ROWS, TN)
        acc = acc + jnp.sum(cols * sel, axis=0, keepdims=True)     # (1, TN)
    out_ref[...] = acc                            # sum over LODs, lane-dense


@jax.jit
def dense_grid_forward(pts, codebook_flat):
    """pts: (N, 3) f32 in [-1, 1); codebook_flat: (K_TOTAL,) f32 -> (N, 1) f32."""
    N = pts.shape[0]
    n_pad = (-N) % TN
    Np = N + n_pad
    pts_t = pts.T                                                  # (3, N)
    if n_pad:
        pts_t = jnp.pad(pts_t, ((0, 0), (0, n_pad)))               # pad points, sliced off later
    cb = jnp.pad(codebook_flat, (0, K_PAD - K_TOTAL)).reshape(N_ROWS, ROW)
    out = pl.pallas_call(
        dense_grid_kernel,
        out_shape=jax.ShapeDtypeStruct((1, Np), jnp.float32),
        grid_spec=pltpu.PrefetchScalarGridSpec(
            num_scalar_prefetch=0,
            grid=(Np // TN,),
            in_specs=[
                pl.BlockSpec((3, TN), lambda i: (0, i)),           # point tile
                pl.BlockSpec((N_ROWS, ROW), lambda i: (0, 0)),     # full padded codebook
            ],
            out_specs=pl.BlockSpec((1, TN), lambda i: (0, i)),     # lane-dense output
        ),
        compiler_params=pltpu.CompilerParams(dimension_semantics=("parallel",)),
    )(pts_t, cb)
    return out[:, :N].T                                            # (N, 1) == (N, feat_dim)


def reference_forward(pts, codebook_flat):
    """Plain-JAX reference of the PyTorch forward ('closest')."""
    p = pts / 2.0 + 0.5
    feats = []
    for res, off in zip(LODS, OFFSETS):
        x = jnp.floor(p[:, 0] * (res - 1)).astype(jnp.int32)
        y = jnp.floor(p[:, 1] * (res - 1)).astype(jnp.int32)
        z = jnp.floor(p[:, 2] * (res - 1)).astype(jnp.int32)
        idx = x + y * res + z * res * res + off
        feats.append(jnp.take(codebook_flat, idx)[:, None, None])  # (N, 1, 1)
    return jnp.concatenate(feats, -1).sum(-1)                      # (N, 1)


if __name__ == "__main__":
    key = jax.random.PRNGKey(0)
    k_pts, k_cb = jax.random.split(key)

    N = 300   # deliberately not a multiple of TN to exercise the padding path
    # points in [-1, 1), consistent with the pts/2 + 0.5 normalization
    pts = jax.random.uniform(k_pts, (N, GRID_DIM), jnp.float32,
                             minval=-1.0, maxval=0.999)

    # codebook init: zeros + randn * 0.01 per LOD, feat_dim = 1, concatenated flat
    codebook_flat = jax.random.normal(k_cb, (K_TOTAL,), jnp.float32) * 0.01

    out = dense_grid_forward(pts, codebook_flat)
    out = jax.block_until_ready(out)

    ref = reference_forward(pts, codebook_flat)
    assert out.shape == (N, FEAT_DIM)
    np.testing.assert_allclose(np.asarray(out), np.asarray(ref),
                               rtol=1e-5, atol=1e-6)
    print("KERNEL_OK")
</pallas_src>

<mosaic_0001>
module attributes {stable_mosaic.version = 11 : i64} {
  func.func @dense_grid_kernel(%arg0: i32, %arg1: memref<3x256xf32, #tpu.memory_space<vmem>>, %arg2: memref<40x128xf32, #tpu.memory_space<vmem>>, %arg3: memref<1x256xf32, #tpu.memory_space<vmem>>) attributes {dimension_semantics = [#tpu.dimension_semantics<parallel>], iteration_bounds = array<i64: 2>, scalar_prefetch = 0 : i64, scratch_operands = 0 : i64, tpu.core_type = #tpu.core_type<tc>, window_params = [{transform_indices = @transform_0, window_bounds = array<i64: 3, 256>}, {pipeline_mode = #tpu.pipeline_mode<synchronous>, transform_indices = @transform_1, window_bounds = array<i64: 40, 128>}, {transform_indices = @transform_2, window_bounds = array<i64: 1, 256>}]} {
    %c0 = arith.constant 0 : index
    %c0_0 = arith.constant 0 : index
    %0 = vector.load %arg1[%c0, %c0_0] : memref<3x256xf32, #tpu.memory_space<vmem>>, vector<3x256xf32>
    %cst = arith.constant 5.000000e-01 : f32
    %1 = vector.broadcast %cst : f32 to vector<3x256xf32>
    %2 = arith.mulf %0, %1 : vector<3x256xf32>
    %cst_1 = arith.constant 5.000000e-01 : f32
    %3 = vector.broadcast %cst_1 : f32 to vector<3x256xf32>
    %4 = arith.addf %2, %3 : vector<3x256xf32>
    %c0_2 = arith.constant 0 : index
    %c0_3 = arith.constant 0 : index
    %5 = vector.load %arg2[%c0_2, %c0_3] : memref<40x128xf32, #tpu.memory_space<vmem>>, vector<40x128xf32>
    %6 = tpu.iota {dimensions = array<i32: 0>} : vector<128x256xi32>
    %7 = tpu.iota {dimensions = array<i32: 0>} : vector<40x256xi32>
    %cst_4 = arith.constant 0.000000e+00 : f32
    %8 = vector.broadcast %cst_4 : f32 to vector<1x256xf32>
    %9 = vector.extract_strided_slice %4 {offsets = [0, 0], sizes = [1, 256], strides = [1, 1]} : vector<3x256xf32> to vector<1x256xf32>
    %cst_5 = arith.constant 3.000000e+00 : f32
    %10 = vector.broadcast %cst_5 : f32 to vector<1x256xf32>
    %11 = arith.mulf %9, %10 : vector<1x256xf32>
    %12 = math.floor %11 : vector<1x256xf32>
    %13 = arith.fptosi %12 : vector<1x256xf32> to vector<1x256xi32>
    %14 = vector.extract_strided_slice %4 {offsets = [1, 0], sizes = [1, 256], strides = [1, 1]} : vector<3x256xf32> to vector<1x256xf32>
    %cst_6 = arith.constant 3.000000e+00 : f32
    %15 = vector.broadcast %cst_6 : f32 to vector<1x256xf32>
    %16 = arith.mulf %14, %15 : vector<1x256xf32>
    %17 = math.floor %16 : vector<1x256xf32>
    %18 = arith.fptosi %17 : vector<1x256xf32> to vector<1x256xi32>
    %19 = vector.extract_strided_slice %4 {offsets = [2, 0], sizes = [1, 256], strides = [1, 1]} : vector<3x256xf32> to vector<1x256xf32>
    %cst_7 = arith.constant 3.000000e+00 : f32
    %20 = vector.broadcast %cst_7 : f32 to vector<1x256xf32>
    %21 = arith.mulf %19, %20 : vector<1x256xf32>
    %22 = math.floor %21 : vector<1x256xf32>
    %23 = arith.fptosi %22 : vector<1x256xf32> to vector<1x256xi32>
    %c4_i32 = arith.constant 4 : i32
    %24 = vector.broadcast %c4_i32 : i32 to vector<1x256xi32>
    %25 = arith.muli %18, %24 : vector<1x256xi32>
    %26 = arith.addi %13, %25 : vector<1x256xi32>
    %c16_i32 = arith.constant 16 : i32
    %27 = vector.broadcast %c16_i32 : i32 to vector<1x256xi32>
    %28 = arith.muli %23, %27 : vector<1x256xi32>
    %29 = arith.addi %26, %28 : vector<1x256xi32>
    %c0_i32 = arith.constant 0 : i32
    %30 = vector.broadcast %c0_i32 : i32 to vector<1x256xi32>
    %31 = arith.addi %29, %30 : vector<1x256xi32>
    %c0_i32_8 = arith.constant 0 : i32
    %c4671_i32 = arith.constant 4671 : i32
    %32 = vector.broadcast %c0_i32_8 : i32 to vector<1x256xi32>
    %33 = arith.maxsi %32, %31 : vector<1x256xi32>
    %34 = vector.broadcast %c4671_i32 : i32 to vector<1x256xi32>
    %35 = arith.minsi %34, %33 : vector<1x256xi32>
    %c7_i32 = arith.constant 7 : i32
    %36 = vector.broadcast %c7_i32 : i32 to vector<1x256xi32>
    %37 = arith.shrsi %35, %36 : vector<1x256xi32>
    %c127_i32 = arith.constant 127 : i32
    %38 = vector.broadcast %c127_i32 : i32 to vector<1x256xi32>
    %39 = arith.andi %35, %38 : vector<1x256xi32>
    %40 = vector.broadcast %39 : vector<1x256xi32> to vector<128x256xi32>
    %41 = arith.cmpi eq, %6, %40 : vector<128x256xi32>
    %42 = arith.extui %41 : vector<128x256xi1> to vector<128x256xi32>
    %43 = arith.sitofp %42 : vector<128x256xi32> to vector<128x256xf32>
    %cst_9 = arith.constant dense<0.000000e+00> : vector<40x256xf32>
    %44 = tpu.matmul %5, %43, %cst_9 {dimension_numbers = #tpu.dot_dimension_numbers<[1], [0], [0], [1], [0, 0, 1, 1], [], []>} : vector<40x128xf32>, vector<128x256xf32>, vector<40x256xf32> -> vector<40x256xf32>
    %45 = vector.broadcast %37 : vector<1x256xi32> to vector<40x256xi32>
    %46 = arith.cmpi eq, %7, %45 : vector<40x256xi32>
    %47 = arith.extui %46 : vector<40x256xi1> to vector<40x256xi32>
    %48 = arith.sitofp %47 : vector<40x256xi32> to vector<40x256xf32>
    %49 = arith.mulf %44, %48 : vector<40x256xf32>
    %cst_10 = arith.constant dense<0.000000e+00> : vector<256xf32>
    %50 = vector.multi_reduction <add>, %49, %cst_10 [0] : vector<40x256xf32> to vector<256xf32>
    %51 = vector.shape_cast %50 : vector<256xf32> to vector<1x256xf32>
    %52 = arith.addf %8, %51 : vector<1x256xf32>
    %53 = vector.extract_strided_slice %4 {offsets = [0, 0], sizes = [1, 256], strides = [1, 1]} : vector<3x256xf32> to vector<1x256xf32>
    %cst_11 = arith.constant 7.000000e+00 : f32
    %54 = vector.broadcast %cst_11 : f32 to vector<1x256xf32>
    %55 = arith.mulf %53, %54 : vector<1x256xf32>
    %56 = math.floor %55 : vector<1x256xf32>
    %57 = arith.fptosi %56 : vector<1x256xf32> to vector<1x256xi32>
    %58 = vector.extract_strided_slice %4 {offsets = [1, 0], sizes = [1, 256], strides = [1, 1]} : vector<3x256xf32> to vector<1x256xf32>
    %cst_12 = arith.constant 7.000000e+00 : f32
    %59 = vector.broadcast %cst_12 : f32 to vector<1x256xf32>
    %60 = arith.mulf %58, %59 : vector<1x256xf32>
    %61 = math.floor %60 : vector<1x256xf32>
    %62 = arith.fptosi %61 : vector<1x256xf32> to vector<1x256xi32>
    %63 = vector.extract_strided_slice %4 {offsets = [2, 0], sizes = [1, 256], strides = [1, 1]} : vector<3x256xf32> to vector<1x256xf32>
    %cst_13 = arith.constant 7.000000e+00 : f32
    %64 = vector.broadcast %cst_13 : f32 to vector<1x256xf32>
    %65 = arith.mulf %63, %64 : vector<1x256xf32>
    %66 = math.floor %65 : vector<1x256xf32>
    %67 = arith.fptosi %66 : vector<1x256xf32> to vector<1x256xi32>
    %c8_i32 = arith.constant 8 : i32
    %68 = vector.broadcast %c8_i32 : i32 to vector<1x256xi32>
    %69 = arith.muli %62, %68 : vector<1x256xi32>
    %70 = arith.addi %57, %69 : vector<1x256xi32>
    %c64_i32 = arith.constant 64 : i32
    %71 = vector.broadcast %c64_i32 : i32 to vector<1x256xi32>
    %72 = arith.muli %67, %71 : vector<1x256xi32>
    %73 = arith.addi %70, %72 : vector<1x256xi32>
    %c64_i32_14 = arith.constant 64 : i32
    %74 = vector.broadcast %c64_i32_14 : i32 to vector<1x256xi32>
    %75 = arith.addi %73, %74 : vector<1x256xi32>
    %c0_i32_15 = arith.constant 0 : i32
    %c4671_i32_16 = arith.constant 4671 : i32
    %76 = vector.broadcast %c0_i32_15 : i32 to vector<1x256xi32>
    %77 = arith.maxsi %76, %75 : vector<1x256xi32>
    %78 = vector.broadcast %c4671_i32_16 : i32 to vector<1x256xi32>
    %79 = arith.minsi %78, %77 : vector<1x256xi32>
    %c7_i32_17 = arith.constant 7 : i32
    %80 = vector.broadcast %c7_i32_17 : i32 to vector<1x256xi32>
    %81 = arith.shrsi %79, %80 : vector<1x256xi32>
    %c127_i32_18 = arith.constant 127 : i32
    %82 = vector.broadcast %c127_i32_18 : i32 to vector<1x256xi32>
    %83 = arith.andi %79, %82 : vector<1x256xi32>
    %84 = vector.broadcast %83 : vector<1x256xi32> to vector<128x256xi32>
    %85 = arith.cmpi eq, %6, %84 : vector<128x256xi32>
    %86 = arith.extui %85 : vector<128x256xi1> to vector<128x256xi32>
    %87 = arith.sitofp %86 : vector<128x256xi32> to vector<128x256xf32>
    %cst_19 = arith.constant dense<0.000000e+00> : vector<40x256xf32>
    %88 = tpu.matmul %5, %87, %cst_19 {dimension_numbers = #tpu.dot_dimension_numbers<[1], [0], [0], [1], [0, 0, 1, 1], [], []>} : vector<40x128xf32>, vector<128x256xf32>, vector<40x256xf32> -> vector<40x256xf32>
    %89 = vector.broadcast %81 : vector<1x256xi32> to vector<40x256xi32>
    %90 = arith.cmpi eq, %7, %89 : vector<40x256xi32>
    %91 = arith.extui %90 : vector<40x256xi1> to vector<40x256xi32>
    %92 = arith.sitofp %91 : vector<40x256xi32> to vector<40x256xf32>
    %93 = arith.mulf %88, %92 : vector<40x256xf32>
    %cst_20 = arith.constant dense<0.000000e+00> : vector<256xf32>
    %94 = vector.multi_reduction <add>, %93, %cst_20 [0] : vector<40x256xf32> to vector<256xf32>
    %95 = vector.shape_cast %94 : vector<256xf32> to vector<1x256xf32>
    %96 = arith.addf %52, %95 : vector<1x256xf32>
    %97 = vector.extract_strided_slice %4 {offsets = [0, 0], sizes = [1, 256], strides = [1, 1]} : vector<3x256xf32> to vector<1x256xf32>
    %cst_21 = arith.constant 1.500000e+01 : f32
    %98 = vector.broadcast %cst_21 : f32 to vector<1x256xf32>
    %99 = arith.mulf %97, %98 : vector<1x256xf32>
    %100 = math.floor %99 : vector<1x256xf32>
    %101 = arith.fptosi %100 : vector<1x256xf32> to vector<1x256xi32>
    %102 = vector.extract_strided_slice %4 {offsets = [1, 0], sizes = [1, 256], strides = [1, 1]} : vector<3x256xf32> to vector<1x256xf32>
    %cst_22 = arith.constant 1.500000e+01 : f32
    %103 = vector.broadcast %cst_22 : f32 to vector<1x256xf32>
    %104 = arith.mulf %102, %103 : vector<1x256xf32>
    %105 = math.floor %104 : vector<1x256xf32>
    %106 = arith.fptosi %105 : vector<1x256xf32> to vector<1x256xi32>
    %107 = vector.extract_strided_slice %4 {offsets = [2, 0], sizes = [1, 256], strides = [1, 1]} : vector<3x256xf32> to vector<1x256xf32>
    %cst_23 = arith.constant 1.500000e+01 : f32
    %108 = vector.broadcast %cst_23 : f32 to vector<1x256xf32>
    %109 = arith.mulf %107, %108 : vector<1x256xf32>
    %110 = math.floor %109 : vector<1x256xf32>
    %111 = arith.fptosi %110 : vector<1x256xf32> to vector<1x256xi32>
    %c16_i32_24 = arith.constant 16 : i32
    %112 = vector.broadcast %c16_i32_24 : i32 to vector<1x256xi32>
    %113 = arith.muli %106, %112 : vector<1x256xi32>
    %114 = arith.addi %101, %113 : vector<1x256xi32>
    %c256_i32 = arith.constant 256 : i32
    %115 = vector.broadcast %c256_i32 : i32 to vector<1x256xi32>
    %116 = arith.muli %111, %115 : vector<1x256xi32>
    %117 = arith.addi %114, %116 : vector<1x256xi32>
    %c576_i32 = arith.constant 576 : i32
    %118 = vector.broadcast %c576_i32 : i32 to vector<1x256xi32>
    %119 = arith.addi %117, %118 : vector<1x256xi32>
    %c0_i32_25 = arith.constant 0 : i32
    %c4671_i32_26 = arith.constant 4671 : i32
    %120 = vector.broadcast %c0_i32_25 : i32 to vector<1x256xi32>
    %121 = arith.maxsi %120, %119 : vector<1x256xi32>
    %122 = vector.broadcast %c4671_i32_26 : i32 to vector<1x256xi32>
    %123 = arith.minsi %122, %121 : vector<1x256xi32>
    %c7_i32_27 = arith.constant 7 : i32
    %124 = vector.broadcast %c7_i32_27 : i32 to vector<1x256xi32>
    %125 = arith.shrsi %123, %124 : vector<1x256xi32>
    %c127_i32_28 = arith.constant 127 : i32
    %126 = vector.broadcast %c127_i32_28 : i32 to vector<1x256xi32>
    %127 = arith.andi %123, %126 : vector<1x256xi32>
    %128 = vector.broadcast %127 : vector<1x256xi32> to vector<128x256xi32>
    %129 = arith.cmpi eq, %6, %128 : vector<128x256xi32>
    %130 = arith.extui %129 : vector<128x256xi1> to vector<128x256xi32>
    %131 = arith.sitofp %130 : vector<128x256xi32> to vector<128x256xf32>
    %cst_29 = arith.constant dense<0.000000e+00> : vector<40x256xf32>
    %132 = tpu.matmul %5, %131, %cst_29 {dimension_numbers = #tpu.dot_dimension_numbers<[1], [0], [0], [1], [0, 0, 1, 1], [], []>} : vector<40x128xf32>, vector<128x256xf32>, vector<40x256xf32> -> vector<40x256xf32>
    %133 = vector.broadcast %125 : vector<1x256xi32> to vector<40x256xi32>
    %134 = arith.cmpi eq, %7, %133 : vector<40x256xi32>
    %135 = arith.extui %134 : vector<40x256xi1> to vector<40x256xi32>
    %136 = arith.sitofp %135 : vector<40x256xi32> to vector<40x256xf32>
    %137 = arith.mulf %132, %136 : vector<40x256xf32>
    %cst_30 = arith.constant dense<0.000000e+00> : vector<256xf32>
    %138 = vector.multi_reduction <add>, %137, %cst_30 [0] : vector<40x256xf32> to vector<256xf32>
    %139 = vector.shape_cast %138 : vector<256xf32> to vector<1x256xf32>
    %140 = arith.addf %96, %139 : vector<1x256xf32>
    %c0_31 = arith.constant 0 : index
    %c0_32 = arith.constant 0 : index
    %141 = vector.load %arg3[%c0_31, %c0_32] : memref<1x256xf32, #tpu.memory_space<vmem>>, vector<1x256xf32>
    tpu.vector_store %arg3[%c0_31, %c0_32], %140 {strides = array<i32>} : memref<1x256xf32, #tpu.memory_space<vmem>>, vector<1x256xf32>,
    return
  }
  func.func @transform_0(%arg0: i32) -> (i32, i32) {
    %c0_i32 = arith.constant 0 : i32
    %c0_i32_0 = arith.constant 0 : i32
    return %c0_i32, %arg0 : i32, i32
  }
  func.func @transform_1(%arg0: i32) -> (i32, i32) {
    %c0_i32 = arith.constant 0 : i32
    %c0_i32_0 = arith.constant 0 : i32
    %c0_i32_1 = arith.constant 0 : i32
    return %c0_i32, %c0_i32_0 : i32, i32
  }
  func.func @transform_2(%arg0: i32) -> (i32, i32) {
    %c0_i32 = arith.constant 0 : i32
    %c0_i32_0 = arith.constant 0 : i32
    return %c0_i32, %arg0 : i32, i32
  }
}

</mosaic_0001>

<llo_original>
// kernel: dense_grid_forward.1
$region0: #{dense_grid_forward.1}
  #allocation0 [shape = 'u32[]', space=smem, size = 0x4, offset = 0x4, fixed_abs, tag = 'smem constant byte address 0x4 - core index']
  #allocation1 [shape = 'u32[144,128]{1,0:T(1,128)}', space=vmem, size = 0x12000, scoped, tag = 'internal scratch']
  %s0 = inlined_call_operand.vmem [shape: f32[3,512], index: 0, kind: input, shape index: {}]
  %s1 = inlined_call_operand.vmem [shape: f32[40,128], index: 1, kind: input, shape index: {}]
  %s2 = inlined_call_operand.vmem [shape: f32[1,512], index: 2, kind: output, shape index: {}]
  %s3 = sld [smem:[#allocation0]]
  $region41: #{dense_grid_forward.1} parent=0
    _
  %s5 = ssub.s32 1, %s3
  %s6 = scalar_select 0, %s5, %s3
  loop: start=0, step=1, limit=4
  $region2: #{dense_grid_forward.1} parent=0 // loop_pre_header
    _
  $region3: #{dense_grid_forward.1} parent=0 // loop_header
    %s8 = sphi 0, %s12
    %p9 = scmp.ge.s32.totalorder %s8, 4
    %s18 = sphi 0, %s20
    %s21 = sphi 0, %s18
    %s22 = sphi 0, %s21
    %s38 = sphi 0, %s22
    %s42 = sphi 0, %s42
    %s44 = sphi 0, %s42
    %s45 = sphi 0, %s44
    %s59 = sphi 0, %s45
    %s65 = sphi 0, %s67
    %s68 = sphi 0, %s65
    %s69 = sphi 0, %s68
    %s85 = sphi 0, %s69
  $region4: #{dense_grid_forward.1} parent=0 // loop_header_branch
    %11 = sbr.rel (%p9) target = $region8
  $region5: #{dense_grid_forward.1} parent=0 // loop_body
    %s13 = ssub.s32 %s8, 1
    %s14 = ssub.s32 %s8, 2
    %s15 = sadd.s32 %s8, 1
    %s16 = ssub.s32 %s8, %s15
    %p17 = scmp.eq.s32.totalorder %s16, 0
    %s19 = sadd.s32 %s18, 1
    %s20 = scalar_select %p17, %s18, %s19
    %p23 = pneg %p17
    %p24 = scmp.eq.s32.totalorder %s8, 1
    %p25 = por %p23, %p24
    %p26 = scmp.ne.s32.totalorder %s18, %s21
    %p27 = scmp.eq.s32.totalorder %s8, 0
    %p28 = por %p26, %p27
    %p29 = scmp.ne.s32.totalorder %s18, %s21
    %p30 = scmp.eq.s32.totalorder %s13, 1
    %p31 = por %p29, %p30
    %p32 = scmp.ne.s32.totalorder %s21, %s22
    %p33 = scmp.eq.s32.totalorder %s13, 0
    %p34 = por %p32, %p33
    %p35 = scmp.ne.s32.totalorder %s21, %s22
    %p36 = scmp.eq.s32.totalorder %s14, 1
    %p37 = por %p35, %p36
    %p39 = scmp.ne.s32.totalorder %s22, %s38
    %p40 = scmp.eq.s32.totalorder %s14, 0
    %p41 = por %p39, %p40
    %s43 = sadd.s32 %s42, 1
    %p46 = scmp.eq.s32.totalorder %s8, 1
    %p47 = scmp.ne.s32.totalorder %s42, %s44
    %p48 = scmp.eq.s32.totalorder %s8, 0
    %p49 = por %p47, %p48
    %p50 = scmp.ne.s32.totalorder %s42, %s44
    %p51 = scmp.eq.s32.totalorder %s13, 1
    %p52 = por %p50, %p51
    %p53 = scmp.ne.s32.totalorder %s44, %s45
    %p54 = scmp.eq.s32.totalorder %s13, 0
    %p55 = por %p53, %p54
    %p56 = scmp.ne.s32.totalorder %s44, %s45
    %p57 = scmp.eq.s32.totalorder %s14, 1
    %p58 = por %p56, %p57
    %p60 = scmp.ne.s32.totalorder %s45, %s59
    %p61 = scmp.eq.s32.totalorder %s14, 0
    %p62 = por %p60, %p61
    %s63 = ssub.s32 %s8, %s15
    %p64 = scmp.eq.s32.totalorder %s63, 0
    %s66 = sadd.s32 %s65, 1
    %s67 = scalar_select %p64, %s65, %s66
    %p70 = pneg %p64
    %p71 = scmp.eq.s32.totalorder %s8, 1
    %p72 = por %p70, %p71
    %p73 = scmp.ne.s32.totalorder %s65, %s68
    %p74 = scmp.eq.s32.totalorder %s8, 0
    %p75 = por %p73, %p74
    %p76 = scmp.ne.s32.totalorder %s65, %s68
    %p77 = scmp.eq.s32.totalorder %s13, 1
    %p78 = por %p76, %p77
    %p79 = scmp.ne.s32.totalorder %s68, %s69
    %p80 = scmp.eq.s32.totalorder %s13, 0
    %p81 = por %p79, %p80
    %p82 = scmp.ne.s32.totalorder %s68, %s69
    %p83 = scmp.eq.s32.totalorder %s14, 1
    %p84 = por %p82, %p83
    %p86 = scmp.ne.s32.totalorder %s69, %s85
    %p87 = scmp.eq.s32.totalorder %s14, 0
    %p88 = por %p86, %p87
    %p89 = scmp.le.s32.totalorder 1, %s8
    %p90 = scmp.lt.s32.totalorder %s8, 3
    %p91 = pnand %p89, %p90
    %p92 = pneg %p91
    // Predicated region
    $region9: #{dense_grid_forward.1} parent=5 // pred_check
      _
    $region10: #{dense_grid_forward.1} parent=5 // pred_check_branch
      %94 = sbr.rel (%p91) target = $region12
    $region11: #{dense_grid_forward.1} parent=5 // pred_region
      %s95 = ssub.s32 %s8, 1
      // Predicated region
      $region13: #{dense_grid_forward.1} parent=11 // pred_check
        %p96 = pneg %p55
      $region14: #{dense_grid_forward.1} parent=11 // pred_check_branch
        %98 = sbr.rel (%p96) target = $region16
      $region15: #{dense_grid_forward.1} parent=11 // pred_region
        _
      $region16: #{dense_grid_forward.1} parent=11 // pred_fallthru
        _
    $region12: #{dense_grid_forward.1} parent=5 // pred_fallthru
      _
    %p99 = scmp.lt.s32.totalorder %s8, 2
    // Predicated region
    $region17: #{dense_grid_forward.1} parent=5 // pred_check
      %p100 = pneg %p99
    $region18: #{dense_grid_forward.1} parent=5 // pred_check_branch
      %102 = sbr.rel (%p100) target = $region20
    $region19: #{dense_grid_forward.1} parent=5 // pred_region
      // Predicated region
      $region21: #{dense_grid_forward.1} parent=19 // pred_check
        %p103 = pneg %p28
      $region22: #{dense_grid_forward.1} parent=19 // pred_check_branch
        %105 = sbr.rel (%p103) target = $region24
      $region23: #{dense_grid_forward.1} parent=19 // pred_region
        %s106 = smul.u32 2, %s8
        %p107 = scmp.lt.s32.totalorder %s106, 3
        %s108 = scalar_select %p107, %s106, 3
        %s109 = smul.addr %s108, 4
        %s110 = scalar_lea.vmem %s0, %s109
        %s111 = smul.u32 2, %s8
      $region24: #{dense_grid_forward.1} parent=19 // pred_fallthru
        _
    $region20: #{dense_grid_forward.1} parent=5 // pred_fallthru
      _
    %p112 = scmp.le.s32.totalorder 1, %s8
    %p113 = scmp.lt.s32.totalorder %s8, 3
    %p114 = pnand %p112, %p113
    %p115 = pneg %p114
    // Predicated region
    $region25: #{dense_grid_forward.1} parent=5 // pred_check
      _
    $region26: #{dense_grid_forward.1} parent=5 // pred_check_branch
      %117 = sbr.rel (%p114) target = $region28
    $region27: #{dense_grid_forward.1} parent=5 // pred_region
      %s118 = ssub.s32 %s8, 1
      %s119 = smul.u32 2, %s13
      %p120 = scmp.lt.s32.totalorder %s119, 3
      %s121 = scalar_select %p120, %s119, 3
      %s122 = smul.addr %s121, 4
      %s123 = scalar_lea.vmem %s0, %s122
      %p124 = pneg %p34
      %p125 = pneg %p31
      %p126 = pneg %p55
      %p127 = pneg %p52
      %p128 = pneg %p81
      %p129 = pneg %p78
      %s130 = smul.u32 2, %s13
      %p131 = scmp.lt.s32.totalorder %s130, 3
      %s132 = scalar_select %p131, %s130, 3
      %s133 = scalar_lea.vmem %s2, %s132
      %s134 = smul.u32 2, %s13
      %p135 = scmp.lt.s32.totalorder %s134, 3
      %s136 = scalar_select %p135, %s134, 3
      %s137 = smul.addr %s136, 4
      %s138 = scalar_lea.vmem %s0, %s137
      %s139 = smul.u32 2, %s13
      %s140 = smul.u32 2, %s13
      %p141 = scmp.lt.s32.totalorder %s140, 3
      %s142 = scalar_select %p141, %s140, 3
      %s143 = scalar_lea.vmem %s2, %s142
      %s144 = smul.u32 2, %s13
      %v145 = vld [vmem:[%s138] sm:$0x77]
      %v146 = vmul.f32 %v145, 0.5
      %v147 = vadd.f32 %v146, 0.5
      %v148 = vld [vmem:[%s1] sm:$0xff]
      %v149 = vld [vmem:[%s1 + $0x8] sm:$0xff]
      %v150 = vld [vmem:[%s1 + $0x10] sm:$0xff]
      %v151 = vld [vmem:[%s1 + $0x18] sm:$0xff]
      %v152 = vld [vmem:[%s1 + $0x20] sm:$0xff]
      %v153 = vlaneseq
      %v154 = vshrl.u32 %v153, 7
      %v155 = vadd.s32 %v154, 8
      %v156 = vadd.s32 %v154, 16
      %v157 = vadd.s32 %v154, 24
      %v158 = vadd.s32 %v154, 32
      %v159 = vadd.s32 %v154, 40
      %v160 = vadd.s32 %v154, 48
      %v161 = vadd.s32 %v154, 56
      %v162 = vadd.s32 %v154, 64
      %v163 = vadd.s32 %v154, 72
      %v164 = vadd.s32 %v154, 80
      %v165 = vadd.s32 %v154, 88
      %v166 = vadd.s32 %v154, 96
      %v167 = vadd.s32 %v154, 104
      %v168 = vadd.s32 %v154, 112
      %v169 = vadd.s32 %v154, 120
      %v170 = vmul.f32 %v147, 3.0
      %v171 = vfloor.f32 %v170
      %v172 = vcvt.f32.s32.to.zero.pseudo %v171
      %v173 = vmul.u32 %v172, 4
      %v174 = vrot.slane %v173, 5
      %v175 = vrot.slane %v174, 4
      %v176 = vadd.s32 %v172, %v175
      %v177 = vmul.u32 %v172, 16
      %v178 = vrot.slane %v177, 6
      %v179 = vrot.slane %v178, 4
      %v180 = vadd.s32 %v176, %v179
      %vm181 = vcmp.gt.s32.totalorder %v180, 0
      %v182 = vsel %vm181, %v180, 0
      %vm183 = vcmp.lt.s32.totalorder %v182, 4671
      %v184 = vsel %vm183, %v182, 4671
      %v185 = vshra.s32 %v184, 7
      %v186 = vand.u32 %v184, 127
      %v187 = vlaneseq
      %v188 = vshrl.u32 %v187, 7
      %v189 = vsub.s32 0, %v188
      %v190 = vrot.slane %v186, %v189
      %v191 = vlaneseq
      %v192 = vshrl.u32 %v191, 7
      %v193 = vsub.s32 4, %v192
      %v194 = vrot.slane %v186, %v193
      %v195 = vlaneseq
      %v196 = vshrl.u32 %v195, 7
      %v197 = vsub.s32 0, %v196
      %v198 = vrot.slane %v190, %v197
      %v199 = vlaneseq
      %v200 = vshrl.u32 %v199, 7
      %v201 = vsub.s32 0, %v200
      %v202 = vrot.slane %v194, %v201
      %vm203 = vcmp.eq.s32.totalorder %v154, %v198
      %vm204 = vcmp.eq.s32.totalorder %v154, %v202
      %vm205 = vcmp.eq.s32.totalorder %v155, %v198
      %vm206 = vcmp.eq.s32.totalorder %v155, %v202
      %vm207 = vcmp.eq.s32.totalorder %v156, %v198
      %vm208 = vcmp.eq.s32.totalorder %v156, %v202
      %vm209 = vcmp.eq.s32.totalorder %v157, %v198
      %vm210 = vcmp.eq.s32.totalorder %v157, %v202
      %vm211 = vcmp.eq.s32.totalorder %v158, %v198
      %vm212 = vcmp.eq.s32.totalorder %v158, %v202
      %vm213 = vcmp.eq.s32.totalorder %v159, %v198
      %vm214 = vcmp.eq.s32.totalorder %v159, %v202
      %vm215 = vcmp.eq.s32.totalorder %v160, %v198
      %vm216 = vcmp.eq.s32.totalorder %v160, %v202
      %vm217 = vcmp.eq.s32.totalorder %v161, %v198
      %vm218 = vcmp.eq.s32.totalorder %v161, %v202
      %vm219 = vcmp.eq.s32.totalorder %v162, %v198
      %vm220 = vcmp.eq.s32.totalorder %v162, %v202
      %vm221 = vcmp.eq.s32.totalorder %v163, %v198
      %vm222 = vcmp.eq.s32.totalorder %v163, %v202
      %vm223 = vcmp.eq.s32.totalorder %v164, %v198
      %vm224 = vcmp.eq.s32.totalorder %v164, %v202
      %vm225 = vcmp.eq.s32.totalorder %v165, %v198
      %vm226 = vcmp.eq.s32.totalorder %v165, %v202
      %vm227 = vcmp.eq.s32.totalorder %v166, %v198
      %vm228 = vcmp.eq.s32.totalorder %v166, %v202
      %vm229 = vcmp.eq.s32.totalorder %v167, %v198
      %vm230 = vcmp.eq.s32.totalorder %v167, %v202
      %vm231 = vcmp.eq.s32.totalorder %v168, %v198
      %vm232 = vcmp.eq.s32.totalorder %v168, %v202
      %vm233 = vcmp.eq.s32.totalorder %v169, %v198
      %vm234 = vcmp.eq.s32.totalorder %v169, %v202
      %v235 = vsel %vm203, 1, 0
      %v236 = vsel %vm204, 1, 0
      %v237 = vsel %vm205, 1, 0
      %v238 = vsel %vm206, 1, 0
      %v239 = vsel %vm207, 1, 0
      %v240 = vsel %vm208, 1, 0
      %v241 = vsel %vm209, 1, 0
      %v242 = vsel %vm210, 1, 0
      %v243 = vsel %vm211, 1, 0
      %v244 = vsel %vm212, 1, 0
      %v245 = vsel %vm213, 1, 0
      %v246 = vsel %vm214, 1, 0
      %v247 = vsel %vm215, 1, 0
      %v248 = vsel %vm216, 1, 0
      %v249 = vsel %vm217, 1, 0
      %v250 = vsel %vm218, 1, 0
      %v251 = vsel %vm219, 1, 0
      %v252 = vsel %vm220, 1, 0
      %v253 = vsel %vm221, 1, 0
      %v254 = vsel %vm222, 1, 0
      %v255 = vsel %vm223, 1, 0
      %v256 = vsel %vm224, 1, 0
      %v257 = vsel %vm225, 1, 0
      %v258 = vsel %vm226, 1, 0
      %v259 = vsel %vm227, 1, 0
      %v260 = vsel %vm228, 1, 0
      %v261 = vsel %vm229, 1, 0
      %v262 = vsel %vm230, 1, 0
      %v263 = vsel %vm231, 1, 0
      %v264 = vsel %vm232, 1, 0
      %v265 = vsel %vm233, 1, 0
      %v266 = vsel %vm234, 1, 0
      %v267 = vcvt.s32.f32 %v235
      %v268 = vcvt.s32.f32 %v236
      %v269 = vcvt.s32.f32 %v237
      %v270 = vcvt.s32.f32 %v238
      %v271 = vcvt.s32.f32 %v239
      %v272 = vcvt.s32.f32 %v240
      %v273 = vcvt.s32.f32 %v241
      %v274 = vcvt.s32.f32 %v242
      %v275 = vcvt.s32.f32 %v243
      %v276 = vcvt.s32.f32 %v244
      %v277 = vcvt.s32.f32 %v245
      %v278 = vcvt.s32.f32 %v246
      %v279 = vcvt.s32.f32 %v247
      %v280 = vcvt.s32.f32 %v248
      %v281 = vcvt.s32.f32 %v249
      %v282 = vcvt.s32.f32 %v250
      %v283 = vcvt.s32.f32 %v251
      %v284 = vcvt.s32.f32 %v252
      %v285 = vcvt.s32.f32 %v253
      %v286 = vcvt.s32.f32 %v254
      %v287 = vcvt.s32.f32 %v255
      %v288 = vcvt.s32.f32 %v256
      %v289 = vcvt.s32.f32 %v257
      %v290 = vcvt.s32.f32 %v258
      %v291 = vcvt.s32.f32 %v259
      %v292 = vcvt.s32.f32 %v260
      %v293 = vcvt.s32.f32 %v261
      %v294 = vcvt.s32.f32 %v262
      %v295 = vcvt.s32.f32 %v263
      %v296 = vcvt.s32.f32 %v264
      %v297 = vcvt.s32.f32 %v265
      %v298 = vcvt.s32.f32 %v266
      %299 = vmatprep.subr.mxu0 %v268
      %300 = vmatpush1.msra.mxu0 %v267
      %301 = vmatprep.subr.mxu0 %v270
      %302 = vmatpush1.msra.mxu0 %v269
      %303 = vmatprep.subr.mxu0 %v272
      %304 = vmatpush1.msra.mxu0 %v271
      %305 = vmatprep.subr.mxu0 %v274
      %306 = vmatpush1.msra.mxu0 %v273
      %307 = vmatprep.subr.mxu0 %v276
      %308 = vmatpush1.msra.mxu0 %v275
      %309 = vmatprep.subr.mxu0 %v278
      %310 = vmatpush1.msra.mxu0 %v277
      %311 = vmatprep.subr.mxu0 %v280
      %312 = vmatpush1.msra.mxu0 %v279
      %313 = vmatprep.subr.mxu0 %v282
      %314 = vmatpush1.msra.mxu0 %v281
      %315 = vmatprep.subr.mxu0 %v284
      %316 = vmatpush1.msra.mxu0 %v283
      %317 = vmatprep.subr.mxu0 %v286
      %318 = vmatpush1.msra.mxu0 %v285
      %319 = vmatprep.subr.mxu0 %v288
      %320 = vmatpush1.msra.mxu0 %v287
      %321 = vmatprep.subr.mxu0 %v290
      %322 = vmatpush1.msra.mxu0 %v289
      %323 = vmatprep.subr.mxu0 %v292
      %324 = vmatpush1.msra.mxu0 %v291
      %325 = vmatprep.subr.mxu0 %v294
      %326 = vmatpush1.msra.mxu0 %v293
      %327 = vmatprep.subr.mxu0 %v296
      %328 = vmatpush1.msra.mxu0 %v295
      %329 = vmatprep.subr.mxu0 %v298
      %330 = vmatpush1.msra.mxu0 %v297
      %331 = vmatprep.subr.mxu0 0.0
      %332 = vmatpush1.msra.mxu0 0.0
      %333 = vmatprep.subr.mxu0 0.0
      %334 = vmatpush1.msra.mxu0 0.0
      %335 = vmatprep.subr.mxu0 0.0
      %336 = vmatpush1.msra.mxu0 0.0
      %337 = vmatprep.subr.mxu0 0.0
      %338 = vmatpush1.msra.mxu0 0.0
      %339 = vmatprep.subr.mxu0 0.0
      %340 = vmatpush1.msra.mxu0 0.0
      %341 = vmatprep.subr.mxu0 0.0
      %342 = vmatpush1.msra.mxu0 0.0
      %343 = vmatprep.subr.mxu0 0.0
      %344 = vmatpush1.msra.mxu0 0.0
      %345 = vmatprep.subr.mxu0 0.0
      %346 = vmatpush1.msra.mxu0 0.0
      %347 = vmatprep.subr.mxu0 0.0
      %348 = vmatpush1.msra.mxu0 0.0
      %349 = vmatprep.subr.mxu0 0.0
      %350 = vmatpush1.msra.mxu0 0.0
      %351 = vmatprep.subr.mxu0 0.0
      %352 = vmatpush1.msra.mxu0 0.0
      %353 = vmatprep.subr.mxu0 0.0
      %354 = vmatpush1.msra.mxu0 0.0
      %355 = vmatprep.subr.mxu0 0.0
      %356 = vmatpush1.msra.mxu0 0.0
      %357 = vmatprep.subr.mxu0 0.0
      %358 = vmatpush1.msra.mxu0 0.0
      %359 = vmatprep.subr.mxu0 0.0
      %360 = vmatpush1.msra.mxu0 0.0
      %361 = vmatprep.subr.mxu0 0.0
      %362 = vmatpush1.msra.mxu0 0.0
      %363 = vmatprep.mubr.f32.mxu0 0.0
      %364 = vmatmul.mubr.f32.gmra.mrb[0].mxu0 %v148
      %v365 = vpop.f32.mrb[0].mxu0
      %v366 = vadd.f32 0.0, %v365
      %v367 = vpop.f32.mrb[0].mxu0
      %v368 = vadd.f32 0.0, %v367
      %369 = vmatprep.mubr.f32.mxu0 0.0
      %370 = vmatmul.mubr.f32.gmra.mrb[0].mxu0 %v149
      %v371 = vpop.f32.mrb[0].mxu0
      %v372 = vadd.f32 0.0, %v371
      %v373 = vpop.f32.mrb[0].mxu0
      %v374 = vadd.f32 0.0, %v373
      %375 = vmatprep.mubr.f32.mxu0 0.0
      %376 = vmatmul.mubr.f32.gmra.mrb[0].mxu0 %v150
      %v377 = vpop.f32.mrb[0].mxu0
      %v378 = vadd.f32 0.0, %v377
      %v379 = vpop.f32.mrb[0].mxu0
      %v380 = vadd.f32 0.0, %v379
      %381 = vmatprep.mubr.f32.mxu0 0.0
      %382 = vmatmul.mubr.f32.gmra.mrb[0].mxu0 %v151
      %v383 = vpop.f32.mrb[0].mxu0
      %v384 = vadd.f32 0.0, %v383
      %v385 = vpop.f32.mrb[0].mxu0
      %v386 = vadd.f32 0.0, %v385
      %387 = vmatprep.mubr.f32.mxu0 0.0
      %388 = vmatmul.mubr.f32.gmra.mrb[0].mxu0 %v152
      %v389 = vpop.f32.mrb[0].mxu0
      %v390 = vadd.f32 0.0, %v389
      %v391 = vpop.f32.mrb[0].mxu0
      %v392 = vadd.f32 0.0, %v391
      %393 = vdwg.mxu0
      %v394 = vlaneseq
      %v395 = vshrl.u32 %v394, 7
      %v396 = vsub.s32 0, %v395
      %v397 = vrot.slane %v185, %v396
      %v398 = vlaneseq
      %v399 = vshrl.u32 %v398, 7
      %v400 = vsub.s32 4, %v399
      %v401 = vrot.slane %v185, %v400
      %v402 = vlaneseq
      %v403 = vshrl.u32 %v402, 7
      %v404 = vsub.s32 0, %v403
      %v405 = vrot.slane %v397, %v404
      %v406 = vlaneseq
      %v407 = vshrl.u32 %v406, 7
      %v408 = vsub.s32 0, %v407
      %v409 = vrot.slane %v401, %v408
      %vm410 = vcmp.eq.s32.totalorder %v154, %v405
      %vm411 = vcmp.eq.s32.totalorder %v154, %v409
      %vm412 = vcmp.eq.s32.totalorder %v155, %v405
      %vm413 = vcmp.eq.s32.totalorder %v155, %v409
      %vm414 = vcmp.eq.s32.totalorder %v156, %v405
      %vm415 = vcmp.eq.s32.totalorder %v156, %v409
      %vm416 = vcmp.eq.s32.totalorder %v157, %v405
      %vm417 = vcmp.eq.s32.totalorder %v157, %v409
      %vm418 = vcmp.eq.s32.totalorder %v158, %v405
      %vm419 = vcmp.eq.s32.totalorder %v158, %v409
      %v420 = vsel %vm410, 1, 0
      %v421 = vsel %vm411, 1, 0
      %v422 = vsel %vm412, 1, 0
      %v423 = vsel %vm413, 1, 0
      %v424 = vsel %vm414, 1, 0
      %v425 = vsel %vm415, 1, 0
      %v426 = vsel %vm416, 1, 0
      %v427 = vsel %vm417, 1, 0
      %v428 = vsel %vm418, 1, 0
      %v429 = vsel %vm419, 1, 0
      %v430 = vcvt.s32.f32 %v420
      %v431 = vcvt.s32.f32 %v421
      %v432 = vcvt.s32.f32 %v422
      %v433 = vcvt.s32.f32 %v423
      %v434 = vcvt.s32.f32 %v424
      %v435 = vcvt.s32.f32 %v425
      %v436 = vcvt.s32.f32 %v426
      %v437 = vcvt.s32.f32 %v427
      %v438 = vcvt.s32.f32 %v428
      %v439 = vcvt.s32.f32 %v429
      %v440 = vmul.f32 %v366, %v430
      %v441 = vmul.f32 %v368, %v431
      %v442 = vmul.f32 %v372, %v432
      %v443 = vmul.f32 %v374, %v433
      %v444 = vmul.f32 %v378, %v434
      %v445 = vmul.f32 %v380, %v435
      %v446 = vmul.f32 %v384, %v436
      %v447 = vmul.f32 %v386, %v437
      %v448 = vmul.f32 %v390, %v438
      %v449 = vmul.f32 %v392, %v439
      %v450 = vadd.f32 %v440, %v442
      %v451 = vadd.f32 %v450, %v444
      %v452 = vadd.f32 %v451, %v446
      %v453 = vadd.f32 %v452, %v448
      %v454 = vrot.slane %v453, 4
      %v455 = vadd.f32 %v453, %v454
      %v456 = vrot.slane %v455, 2
      %v457 = vadd.f32 %v455, %v456
      %v458 = vrot.slane %v457, 1
      %v459 = vadd.f32 %v457, %v458
      %v460 = vadd.f32 %v441, %v443
      %v461 = vadd.f32 %v460, %v445
      %v462 = vadd.f32 %v461, %v447
      %v463 = vadd.f32 %v462, %v449
      %v464 = vrot.slane %v463, 4
      %v465 = vadd.f32 %v463, %v464
      %v466 = vrot.slane %v465, 2
      %v467 = vadd.f32 %v465, %v466
      %v468 = vrot.slane %v467, 1
      %v469 = vadd.f32 %v467, %v468
      %v470 = vadd.f32 %v459, 0.0
      %v471 = vadd.f32 %v469, 0.0
      %v472 = vmul.f32 %v147, 7.0
      %v473 = vfloor.f32 %v472
      %v474 = vcvt.f32.s32.to.zero.pseudo %v473
      %v475 = vmul.u32 %v474, 8
      %v476 = vrot.slane %v475, 5
      %v477 = vrot.slane %v476, 4
      %v478 = vadd.s32 %v474, %v477
      %v479 = vmul.u32 %v474, 64
      %v480 = vrot.slane %v479, 6
      %v481 = vrot.slane %v480, 4
      %v482 = vadd.s32 %v478, %v481
      %v483 = vadd.s32 %v482, 64
      %vm484 = vcmp.gt.s32.totalorder %v483, 0
      %v485 = vsel %vm484, %v483, 0
      %vm486 = vcmp.lt.s32.totalorder %v485, 4671
      %v487 = vsel %vm486, %v485, 4671
      %v488 = vshra.s32 %v487, 7
      %v489 = vand.u32 %v487, 127
      %v490 = vlaneseq
      %v491 = vshrl.u32 %v490, 7
      %v492 = vsub.s32 0, %v491
      %v493 = vrot.slane %v489, %v492
      %v494 = vlaneseq
      %v495 = vshrl.u32 %v494, 7
      %v496 = vsub.s32 4, %v495
      %v497 = vrot.slane %v489, %v496
      %v498 = vlaneseq
      %v499 = vshrl.u32 %v498, 7
      %v500 = vsub.s32 0, %v499
      %v501 = vrot.slane %v493, %v500
      %v502 = vlaneseq
      %v503 = vshrl.u32 %v502, 7
      %v504 = vsub.s32 0, %v503
      %v505 = vrot.slane %v497, %v504
      %vm506 = vcmp.eq.s32.totalorder %v154, %v501
      %vm507 = vcmp.eq.s32.totalorder %v154, %v505
      %vm508 = vcmp.eq.s32.totalorder %v155, %v501
      %vm509 = vcmp.eq.s32.totalorder %v155, %v505
      %vm510 = vcmp.eq.s32.totalorder %v156, %v501
      %vm511 = vcmp.eq.s32.totalorder %v156, %v505
      %vm512 = vcmp.eq.s32.totalorder %v157, %v501
      %vm513 = vcmp.eq.s32.totalorder %v157, %v505
      %vm514 = vcmp.eq.s32.totalorder %v158, %v501
      %vm515 = vcmp.eq.s32.totalorder %v158, %v505
      %vm516 = vcmp.eq.s32.totalorder %v159, %v501
      %vm517 = vcmp.eq.s32.totalorder %v159, %v505
      %vm518 = vcmp.eq.s32.totalorder %v160, %v501
      %vm519 = vcmp.eq.s32.totalorder %v160, %v505
      %vm520 = vcmp.eq.s32.totalorder %v161, %v501
      %vm521 = vcmp.eq.s32.totalorder %v161, %v505
      %vm522 = vcmp.eq.s32.totalorder %v162, %v501
      %vm523 = vcmp.eq.s32.totalorder %v162, %v505
      %vm524 = vcmp.eq.s32.totalorder %v163, %v501
      %vm525 = vcmp.eq.s32.totalorder %v163, %v505
      %vm526 = vcmp.eq.s32.totalorder %v164, %v501
      %vm527 = vcmp.eq.s32.totalorder %v164, %v505
      %vm528 = vcmp.eq.s32.totalorder %v165, %v501
      %vm529 = vcmp.eq.s32.totalorder %v165, %v505
      %vm530 = vcmp.eq.s32.totalorder %v166, %v501
      %vm531 = vcmp.eq.s32.totalorder %v166, %v505
      %vm532 = vcmp.eq.s32.totalorder %v167, %v501
      %vm533 = vcmp.eq.s32.totalorder %v167, %v505
      %vm534 = vcmp.eq.s32.totalorder %v168, %v501
      %vm535 = vcmp.eq.s32.totalorder %v168, %v505
      %vm536 = vcmp.eq.s32.totalorder %v169, %v501
      %vm537 = vcmp.eq.s32.totalorder %v169, %v505
      %v538 = vsel %vm506, 1, 0
      %v539 = vsel %vm507, 1, 0
      %v540 = vsel %vm508, 1, 0
      %v541 = vsel %vm509, 1, 0
      %v542 = vsel %vm510, 1, 0
      %v543 = vsel %vm511, 1, 0
      %v544 = vsel %vm512, 1, 0
      %v545 = vsel %vm513, 1, 0
      %v546 = vsel %vm514, 1, 0
      %v547 = vsel %vm515, 1, 0
      %v548 = vsel %vm516, 1, 0
      %v549 = vsel %vm517, 1, 0
      %v550 = vsel %vm518, 1, 0
      %v551 = vsel %vm519, 1, 0
      %v552 = vsel %vm520, 1, 0
      %v553 = vsel %vm521, 1, 0
      %v554 = vsel %vm522, 1, 0
      %v555 = vsel %vm523, 1, 0
      %v556 = vsel %vm524, 1, 0
      %v557 = vsel %vm525, 1, 0
      %v558 = vsel %vm526, 1, 0
      %v559 = vsel %vm527, 1, 0
      %v560 = vsel %vm528, 1, 0
      %v561 = vsel %vm529, 1, 0
      %v562 = vsel %vm530, 1, 0
      %v563 = vsel %vm531, 1, 0
      %v564 = vsel %vm532, 1, 0
      %v565 = vsel %vm533, 1, 0
      %v566 = vsel %vm534, 1, 0
      %v567 = vsel %vm535, 1, 0
      %v568 = vsel %vm536, 1, 0
      %v569 = vsel %vm537, 1, 0
      %v570 = vcvt.s32.f32 %v538
      %v571 = vcvt.s32.f32 %v539
      %v572 = vcvt.s32.f32 %v540
      %v573 = vcvt.s32.f32 %v541
      %v574 = vcvt.s32.f32 %v542
      %v575 = vcvt.s32.f32 %v543
      %v576 = vcvt.s32.f32 %v544
      %v577 = vcvt.s32.f32 %v545
      %v578 = vcvt.s32.f32 %v546
      %v579 = vcvt.s32.f32 %v547
      %v580 = vcvt.s32.f32 %v548
      %v581 = vcvt.s32.f32 %v549
      %v582 = vcvt.s32.f32 %v550
      %v583 = vcvt.s32.f32 %v551
      %v584 = vcvt.s32.f32 %v552
      %v585 = vcvt.s32.f32 %v553
      %v586 = vcvt.s32.f32 %v554
      %v587 = vcvt.s32.f32 %v555
      %v588 = vcvt.s32.f32 %v556
      %v589 = vcvt.s32.f32 %v557
      %v590 = vcvt.s32.f32 %v558
      %v591 = vcvt.s32.f32 %v559
      %v592 = vcvt.s32.f32 %v560
      %v593 = vcvt.s32.f32 %v561
      %v594 = vcvt.s32.f32 %v562
      %v595 = vcvt.s32.f32 %v563
      %v596 = vcvt.s32.f32 %v564
      %v597 = vcvt.s32.f32 %v565
      %v598 = vcvt.s32.f32 %v566
      %v599 = vcvt.s32.f32 %v567
      %v600 = vcvt.s32.f32 %v568
      %v601 = vcvt.s32.f32 %v569
      %602 = vmatprep.subr.mxu0 %v571
      %603 = vmatpush1.msra.mxu0 %v570
      %604 = vmatprep.subr.mxu0 %v573
      %605 = vmatpush1.msra.mxu0 %v572
      %606 = vmatprep.subr.mxu0 %v575
      %607 = vmatpush1.msra.mxu0 %v574
      %608 = vmatprep.subr.mxu0 %v577
      %609 = vmatpush1.msra.mxu0 %v576
      %610 = vmatprep.subr.mxu0 %v579
      %611 = vmatpush1.msra.mxu0 %v578
      %612 = vmatprep.subr.mxu0 %v581
      %613 = vmatpush1.msra.mxu0 %v580
      %614 = vmatprep.subr.mxu0 %v583
      %615 = vmatpush1.msra.mxu0 %v582
      %616 = vmatprep.subr.mxu0 %v585
      %617 = vmatpush1.msra.mxu0 %v584
      %618 = vmatprep.subr.mxu0 %v587
      %619 = vmatpush1.msra.mxu0 %v586
      %620 = vmatprep.subr.mxu0 %v589
      %621 = vmatpush1.msra.mxu0 %v588
      %622 = vmatprep.subr.mxu0 %v591
      %623 = vmatpush1.msra.mxu0 %v590
      %624 = vmatprep.subr.mxu0 %v593
      %625 = vmatpush1.msra.mxu0 %v592
      %626 = vmatprep.subr.mxu0 %v595
      %627 = vmatpush1.msra.mxu0 %v594
      %628 = vmatprep.subr.mxu0 %v597
      %629 = vmatpush1.msra.mxu0 %v596
      %630 = vmatprep.subr.mxu0 %v599
      %631 = vmatpush1.msra.mxu0 %v598
      %632 = vmatprep.subr.mxu0 %v601
      %633 = vmatpush1.msra.mxu0 %v600
      %634 = vmatprep.subr.mxu0 0.0
      %635 = vmatpush1.msra.mxu0 0.0
      %636 = vmatprep.subr.mxu0 0.0
      %637 = vmatpush1.msra.mxu0 0.0
      %638 = vmatprep.subr.mxu0 0.0
      %639 = vmatpush1.msra.mxu0 0.0
      %640 = vmatprep.subr.mxu0 0.0
      %641 = vmatpush1.msra.mxu0 0.0
      %642 = vmatprep.subr.mxu0 0.0
      %643 = vmatpush1.msra.mxu0 0.0
      %644 = vmatprep.subr.mxu0 0.0
      %645 = vmatpush1.msra.mxu0 0.0
      %646 = vmatprep.subr.mxu0 0.0
      %647 = vmatpush1.msra.mxu0 0.0
      %648 = vmatprep.subr.mxu0 0.0
      %649 = vmatpush1.msra.mxu0 0.0
      %650 = vmatprep.subr.mxu0 0.0
      %651 = vmatpush1.msra.mxu0 0.0
      %652 = vmatprep.subr.mxu0 0.0
      %653 = vmatpush1.msra.mxu0 0.0
      %654 = vmatprep.subr.mxu0 0.0
      %655 = vmatpush1.msra.mxu0 0.0
      %656 = vmatprep.subr.mxu0 0.0
      %657 = vmatpush1.msra.mxu0 0.0
      %658 = vmatprep.subr.mxu0 0.0
      %659 = vmatpush1.msra.mxu0 0.0
      %660 = vmatprep.subr.mxu0 0.0
      %661 = vmatpush1.msra.mxu0 0.0
      %662 = vmatprep.subr.mxu0 0.0
      %663 = vmatpush1.msra.mxu0 0.0
      %664 = vmatprep.subr.mxu0 0.0
      %665 = vmatpush1.msra.mxu0 0.0
      %666 = vmatprep.mubr.f32.mxu0 0.0
      %667 = vmatmul.mubr.f32.gmra.mrb[0].mxu0 %v148
      %v668 = vpop.f32.mrb[0].mxu0
      %v669 = vadd.f32 0.0, %v668
      %v670 = vpop.f32.mrb[0].mxu0
      %v671 = vadd.f32 0.0, %v670
      %672 = vmatprep.mubr.f32.mxu0 0.0
      %673 = vmatmul.mubr.f32.gmra.mrb[0].mxu0 %v149
      %v674 = vpop.f32.mrb[0].mxu0
      %v675 = vadd.f32 0.0, %v674
      %v676 = vpop.f32.mrb[0].mxu0
      %v677 = vadd.f32 0.0, %v676
      %678 = vmatprep.mubr.f32.mxu0 0.0
      %679 = vmatmul.mubr.f32.gmra.mrb[0].mxu0 %v150
      %v680 = vpop.f32.mrb[0].mxu0
      %v681 = vadd.f32 0.0, %v680
      %v682 = vpop.f32.mrb[0].mxu0
      %v683 = vadd.f32 0.0, %v682
      %684 = vmatprep.mubr.f32.mxu0 0.0
      %685 = vmatmul.mubr.f32.gmra.mrb[0].mxu0 %v151
      %v686 = vpop.f32.mrb[0].mxu0
      %v687 = vadd.f32 0.0, %v686
      %v688 = vpop.f32.mrb[0].mxu0
      %v689 = vadd.f32 0.0, %v688
      %690 = vmatprep.mubr.f32.mxu0 0.0
      %691 = vmatmul.mubr.f32.gmra.mrb[0].mxu0 %v152
      %v692 = vpop.f32.mrb[0].mxu0
      %v693 = vadd.f32 0.0, %v692
      %v694 = vpop.f32.mrb[0].mxu0
      %v695 = vadd.f32 0.0, %v694
      %696 = vdwg.mxu0
      %v697 = vlaneseq
      %v698 = vshrl.u32 %v697, 7
      %v699 = vsub.s32 0, %v698
      %v700 = vrot.slane %v488, %v699
      %v701 = vlaneseq
      %v702 = vshrl.u32 %v701, 7
      %v703 = vsub.s32 4, %v702
      %v704 = vrot.slane %v488, %v703
      %v705 = vlaneseq
      %v706 = vshrl.u32 %v705, 7
      %v707 = vsub.s32 0, %v706
      %v708 = vrot.slane %v700, %v707
      %v709 = vlaneseq
      %v710 = vshrl.u32 %v709, 7
      %v711 = vsub.s32 0, %v710
      %v712 = vrot.slane %v704, %v711
      %vm713 = vcmp.eq.s32.totalorder %v154, %v708
      %vm714 = vcmp.eq.s32.totalorder %v154, %v712
      %vm715 = vcmp.eq.s32.totalorder %v155, %v708
      %vm716 = vcmp.eq.s32.totalorder %v155, %v712
      %vm717 = vcmp.eq.s32.totalorder %v156, %v708
      %vm718 = vcmp.eq.s32.totalorder %v156, %v712
      %vm719 = vcmp.eq.s32.totalorder %v157, %v708
      %vm720 = vcmp.eq.s32.totalorder %v157, %v712
      %vm721 = vcmp.eq.s32.totalorder %v158, %v708
      %vm722 = vcmp.eq.s32.totalorder %v158, %v712
      %v723 = vsel %vm713, 1, 0
      %v724 = vsel %vm714, 1, 0
      %v725 = vsel %vm715, 1, 0
      %v726 = vsel %vm716, 1, 0
      %v727 = vsel %vm717, 1, 0
      %v728 = vsel %vm718, 1, 0
      %v729 = vsel %vm719, 1, 0
      %v730 = vsel %vm720, 1, 0
      %v731 = vsel %vm721, 1, 0
      %v732 = vsel %vm722, 1, 0
      %v733 = vcvt.s32.f32 %v723
      %v734 = vcvt.s32.f32 %v724
      %v735 = vcvt.s32.f32 %v725
      %v736 = vcvt.s32.f32 %v726
      %v737 = vcvt.s32.f32 %v727
      %v738 = vcvt.s32.f32 %v728
      %v739 = vcvt.s32.f32 %v729
      %v740 = vcvt.s32.f32 %v730
      %v741 = vcvt.s32.f32 %v731
      %v742 = vcvt.s32.f32 %v732
      %v743 = vmul.f32 %v669, %v733
      %v744 = vmul.f32 %v671, %v734
      %v745 = vmul.f32 %v675, %v735
      %v746 = vmul.f32 %v677, %v736
      %v747 = vmul.f32 %v681, %v737
      %v748 = vmul.f32 %v683, %v738
      %v749 = vmul.f32 %v687, %v739
      %v750 = vmul.f32 %v689, %v740
      %v751 = vmul.f32 %v693, %v741
      %v752 = vmul.f32 %v695, %v742
      %v753 = vadd.f32 %v743, %v745
      %v754 = vadd.f32 %v753, %v747
      %v755 = vadd.f32 %v754, %v749
      %v756 = vadd.f32 %v755, %v751
      %v757 = vrot.slane %v756, 4
      %v758 = vadd.f32 %v756, %v757
      %v759 = vrot.slane %v758, 2
      %v760 = vadd.f32 %v758, %v759
      %v761 = vrot.slane %v760, 1
      %v762 = vadd.f32 %v760, %v761
      %v763 = vadd.f32 %v744, %v746
      %v764 = vadd.f32 %v763, %v748
      %v765 = vadd.f32 %v764, %v750
      %v766 = vadd.f32 %v765, %v752
      %v767 = vrot.slane %v766, 4
      %v768 = vadd.f32 %v766, %v767
      %v769 = vrot.slane %v768, 2
      %v770 = vadd.f32 %v768, %v769
      %v771 = vrot.slane %v770, 1
      %v772 = vadd.f32 %v770, %v771
      %v773 = vadd.f32 %v470, %v762
      %v774 = vadd.f32 %v471, %v772
      %v775 = vmul.f32 %v147, 15.0
      %v776 = vfloor.f32 %v775
      %v777 = vcvt.f32.s32.to.zero.pseudo %v776
      %v778 = vmul.u32 %v777, 16
      %v779 = vrot.slane %v778, 5
      %v780 = vrot.slane %v779, 4
      %v781 = vadd.s32 %v777, %v780
      %v782 = vmul.u32 %v777, 256
      %v783 = vrot.slane %v782, 6
      %v784 = vrot.slane %v783, 4
      %v785 = vadd.s32 %v781, %v784
      %v786 = vadd.s32 %v785, 576
      %vm787 = vcmp.gt.s32.totalorder %v786, 0
      %v788 = vsel %vm787, %v786, 0
      %vm789 = vcmp.lt.s32.totalorder %v788, 4671
      %v790 = vsel %vm789, %v788, 4671
      %v791 = vshra.s32 %v790, 7
      %v792 = vand.u32 %v790, 127
      %v793 = vlaneseq
      %v794 = vshrl.u32 %v793, 7
      %v795 = vsub.s32 0, %v794
      %v796 = vrot.slane %v792, %v795
      %v797 = vlaneseq
      %v798 = vshrl.u32 %v797, 7
      %v799 = vsub.s32 4, %v798
      %v800 = vrot.slane %v792, %v799
      %v801 = vlaneseq
      %v802 = vshrl.u32 %v801, 7
      %v803 = vsub.s32 0, %v802
      %v804 = vrot.slane %v796, %v803
      %v805 = vlaneseq
      %v806 = vshrl.u32 %v805, 7
      %v807 = vsub.s32 0, %v806
      %v808 = vrot.slane %v800, %v807
      %vm809 = vcmp.eq.s32.totalorder %v154, %v804
      %vm810 = vcmp.eq.s32.totalorder %v154, %v808
      %vm811 = vcmp.eq.s32.totalorder %v155, %v804
      %vm812 = vcmp.eq.s32.totalorder %v155, %v808
      %vm813 = vcmp.eq.s32.totalorder %v156, %v804
      %vm814 = vcmp.eq.s32.totalorder %v156, %v808
      %vm815 = vcmp.eq.s32.totalorder %v157, %v804
      %vm816 = vcmp.eq.s32.totalorder %v157, %v808
      %vm817 = vcmp.eq.s32.totalorder %v158, %v804
      %vm818 = vcmp.eq.s32.totalorder %v158, %v808
      %vm819 = vcmp.eq.s32.totalorder %v159, %v804
      %vm820 = vcmp.eq.s32.totalorder %v159, %v808
      %vm821 = vcmp.eq.s32.totalorder %v160, %v804
      %vm822 = vcmp.eq.s32.totalorder %v160, %v808
      %vm823 = vcmp.eq.s32.totalorder %v161, %v804
      %vm824 = vcmp.eq.s32.totalorder %v161, %v808
      %vm825 = vcmp.eq.s32.totalorder %v162, %v804
      %vm826 = vcmp.eq.s32.totalorder %v162, %v808
      %vm827 = vcmp.eq.s32.totalorder %v163, %v804
      %vm828 = vcmp.eq.s32.totalorder %v163, %v808
      %vm829 = vcmp.eq.s32.totalorder %v164, %v804
      %vm830 = vcmp.eq.s32.totalorder %v164, %v808
      %vm831 = vcmp.eq.s32.totalorder %v165, %v804
      %vm832 = vcmp.eq.s32.totalorder %v165, %v808
      %vm833 = vcmp.eq.s32.totalorder %v166, %v804
      %vm834 = vcmp.eq.s32.totalorder %v166, %v808
      %vm835 = vcmp.eq.s32.totalorder %v167, %v804
      %vm836 = vcmp.eq.s32.totalorder %v167, %v808
      %vm837 = vcmp.eq.s32.totalorder %v168, %v804
      %vm838 = vcmp.eq.s32.totalorder %v168, %v808
      %vm839 = vcmp.eq.s32.totalorder %v169, %v804
      %vm840 = vcmp.eq.s32.totalorder %v169, %v808
      %v841 = vsel %vm809, 1, 0
      %v842 = vsel %vm810, 1, 0
      %v843 = vsel %vm811, 1, 0
      %v844 = vsel %vm812, 1, 0
      %v845 = vsel %vm813, 1, 0
      %v846 = vsel %vm814, 1, 0
      %v847 = vsel %vm815, 1, 0
      %v848 = vsel %vm816, 1, 0
      %v849 = vsel %vm817, 1, 0
      %v850 = vsel %vm818, 1, 0
      %v851 = vsel %vm819, 1, 0
      %v852 = vsel %vm820, 1, 0
      %v853 = vsel %vm821, 1, 0
      %v854 = vsel %vm822, 1, 0
      %v855 = vsel %vm823, 1, 0
      %v856 = vsel %vm824, 1, 0
      %v857 = vsel %vm825, 1, 0
      %v858 = vsel %vm826, 1, 0
      %v859 = vsel %vm827, 1, 0
      %v860 = vsel %vm828, 1, 0
      %v861 = vsel %vm829, 1, 0
      %v862 = vsel %vm830, 1, 0
      %v863 = vsel %vm831, 1, 0
      %v864 = vsel %vm832, 1, 0
      %v865 = vsel %vm833, 1, 0
      %v866 = vsel %vm834, 1, 0
      %v867 = vsel %vm835, 1, 0
      %v868 = vsel %vm836, 1, 0
      %v869 = vsel %vm837, 1, 0
      %v870 = vsel %vm838, 1, 0
      %v871 = vsel %vm839, 1, 0
      %v872 = vsel %vm840, 1, 0
      %v873 = vcvt.s32.f32 %v841
      %v874 = vcvt.s32.f32 %v842
      %v875 = vcvt.s32.f32 %v843
      %v876 = vcvt.s32.f32 %v844
      %v877 = vcvt.s32.f32 %v845
      %v878 = vcvt.s32.f32 %v846
      %v879 = vcvt.s32.f32 %v847
      %v880 = vcvt.s32.f32 %v848
      %v881 = vcvt.s32.f32 %v849
      %v882 = vcvt.s32.f32 %v850
      %v883 = vcvt.s32.f32 %v851
      %v884 = vcvt.s32.f32 %v852
      %v885 = vcvt.s32.f32 %v853
      %v886 = vcvt.s32.f32 %v854
      %v887 = vcvt.s32.f32 %v855
      %v888 = vcvt.s32.f32 %v856
      %v889 = vcvt.s32.f32 %v857
      %v890 = vcvt.s32.f32 %v858
      %v891 = vcvt.s32.f32 %v859
      %v892 = vcvt.s32.f32 %v860
      %v893 = vcvt.s32.f32 %v861
      %v894 = vcvt.s32.f32 %v862
      %v895 = vcvt.s32.f32 %v863
      %v896 = vcvt.s32.f32 %v864
      %v897 = vcvt.s32.f32 %v865
      %v898 = vcvt.s32.f32 %v866
      %v899 = vcvt.s32.f32 %v867
      %v900 = vcvt.s32.f32 %v868
      %v901 = vcvt.s32.f32 %v869
      %v902 = vcvt.s32.f32 %v870
      %v903 = vcvt.s32.f32 %v871
      %v904 = vcvt.s32.f32 %v872
      %905 = vmatprep.subr.mxu0 %v874
      %906 = vmatpush1.msra.mxu0 %v873
      %907 = vmatprep.subr.mxu0 %v876
      %908 = vmatpush1.msra.mxu0 %v875
      %909 = vmatprep.subr.mxu0 %v878
      %910 = vmatpush1.msra.mxu0 %v877
      %911 = vmatprep.subr.mxu0 %v880
      %912 = vmatpush1.msra.mxu0 %v879
      %913 = vmatprep.subr.mxu0 %v882
      %914 = vmatpush1.msra.mxu0 %v881
      %915 = vmatprep.subr.mxu0 %v884
      %916 = vmatpush1.msra.mxu0 %v883
      %917 = vmatprep.subr.mxu0 %v886
      %918 = vmatpush1.msra.mxu0 %v885
      %919 = vmatprep.subr.mxu0 %v888
      %920 = vmatpush1.msra.mxu0 %v887
      %921 = vmatprep.subr.mxu0 %v890
      %922 = vmatpush1.msra.mxu0 %v889
      %923 = vmatprep.subr.mxu0 %v892
      %924 = vmatpush1.msra.mxu0 %v891
      %925 = vmatprep.subr.mxu0 %v894
      %926 = vmatpush1.msra.mxu0 %v893
      %927 = vmatprep.subr.mxu0 %v896
      %928 = vmatpush1.msra.mxu0 %v895
      %929 = vmatprep.subr.mxu0 %v898
      %930 = vmatpush1.msra.mxu0 %v897
      %931 = vmatprep.subr.mxu0 %v900
      %932 = vmatpush1.msra.mxu0 %v899
      %933 = vmatprep.subr.mxu0 %v902
      %934 = vmatpush1.msra.mxu0 %v901
      %935 = vmatprep.subr.mxu0 %v904
      %936 = vmatpush1.msra.mxu0 %v903
      %937 = vmatprep.subr.mxu0 0.0
      %938 = vmatpush1.msra.mxu0 0.0
      %939 = vmatprep.subr.mxu0 0.0
      %940 = vmatpush1.msra.mxu0 0.0
      %941 = vmatprep.subr.mxu0 0.0
      %942 = vmatpush1.msra.mxu0 0.0
      %943 = vmatprep.subr.mxu0 0.0
      %944 = vmatpush1.msra.mxu0 0.0
      %945 = vmatprep.subr.mxu0 0.0
      %946 = vmatpush1.msra.mxu0 0.0
      %947 = vmatprep.subr.mxu0 0.0
      %948 = vmatpush1.msra.mxu0 0.0
      %949 = vmatprep.subr.mxu0 0.0
      %950 = vmatpush1.msra.mxu0 0.0
      %951 = vmatprep.subr.mxu0 0.0
      %952 = vmatpush1.msra.mxu0 0.0
      %953 = vmatprep.subr.mxu0 0.0
      %954 = vmatpush1.msra.mxu0 0.0
      %955 = vmatprep.subr.mxu0 0.0
      %956 = vmatpush1.msra.mxu0 0.0
      %957 = vmatprep.subr.mxu0 0.0
      %958 = vmatpush1.msra.mxu0 0.0
      %959 = vmatprep.subr.mxu0 0.0
      %960 = vmatpush1.msra.mxu0 0.0
      %961 = vmatprep.subr.mxu0 0.0
      %962 = vmatpush1.msra.mxu0 0.0
      %963 = vmatprep.subr.mxu0 0.0
      %964 = vmatpush1.msra.mxu0 0.0
      %965 = vmatprep.subr.mxu0 0.0
      %966 = vmatpush1.msra.mxu0 0.0
      %967 = vmatprep.subr.mxu0 0.0
      %968 = vmatpush1.msra.mxu0 0.0
      %969 = vmatprep.mubr.f32.mxu0 0.0
      %970 = vmatmul.mubr.f32.gmra.mrb[0].mxu0 %v148
      %v971 = vpop.f32.mrb[0].mxu0
      %v972 = vadd.f32 0.0, %v971
      %v973 = vpop.f32.mrb[0].mxu0
      %v974 = vadd.f32 0.0, %v973
      %975 = vmatprep.mubr.f32.mxu0 0.0
      %976 = vmatmul.mubr.f32.gmra.mrb[0].mxu0 %v149
      %v977 = vpop.f32.mrb[0].mxu0
      %v978 = vadd.f32 0.0, %v977
      %v979 = vpop.f32.mrb[0].mxu0
      %v980 = vadd.f32 0.0, %v979
      %981 = vmatprep.mubr.f32.mxu0 0.0
      %982 = vmatmul.mubr.f32.gmra.mrb[0].mxu0 %v150
      %v983 = vpop.f32.mrb[0].mxu0
      %v984 = vadd.f32 0.0, %v983
      %v985 = vpop.f32.mrb[0].mxu0
      %v986 = vadd.f32 0.0, %v985
      %987 = vmatprep.mubr.f32.mxu0 0.0
      %988 = vmatmul.mubr.f32.gmra.mrb[0].mxu0 %v151
      %v989 = vpop.f32.mrb[0].mxu0
      %v990 = vadd.f32 0.0, %v989
      %v991 = vpop.f32.mrb[0].mxu0
      %v992 = vadd.f32 0.0, %v991
      %993 = vmatprep.mubr.f32.mxu0 0.0
      %994 = vmatmul.mubr.f32.gmra.mrb[0].mxu0 %v152
      %v995 = vpop.f32.mrb[0].mxu0
      %v996 = vadd.f32 0.0, %v995
      %v997 = vpop.f32.mrb[0].mxu0
      %v998 = vadd.f32 0.0, %v997
      %999 = vdwg.mxu0
      %v1000 = vlaneseq
      %v1001 = vshrl.u32 %v1000, 7
      %v1002 = vsub.s32 0, %v1001
      %v1003 = vrot.slane %v791, %v1002
      %v1004 = vlaneseq
      %v1005 = vshrl.u32 %v1004, 7
      %v1006 = vsub.s32 4, %v1005
      %v1007 = vrot.slane %v791, %v1006
      %v1008 = vlaneseq
      %v1009 = vshrl.u32 %v1008, 7
      %v1010 = vsub.s32 0, %v1009
      %v1011 = vrot.slane %v1003, %v1010
      %v1012 = vlaneseq
      %v1013 = vshrl.u32 %v1012, 7
      %v1014 = vsub.s32 0, %v1013
      %v1015 = vrot.slane %v1007, %v1014
      %vm1016 = vcmp.eq.s32.totalorder %v154, %v1011
      %vm1017 = vcmp.eq.s32.totalorder %v154, %v1015
      %vm1018 = vcmp.eq.s32.totalorder %v155, %v1011
      %vm1019 = vcmp.eq.s32.totalorder %v155, %v1015
      %vm1020 = vcmp.eq.s32.totalorder %v156, %v1011
      %vm1021 = vcmp.eq.s32.totalorder %v156, %v1015
      %vm1022 = vcmp.eq.s32.totalorder %v157, %v1011
      %vm1023 = vcmp.eq.s32.totalorder %v157, %v1015
      %vm1024 = vcmp.eq.s32.totalorder %v158, %v1011
      %vm1025 = vcmp.eq.s32.totalorder %v158, %v1015
      %v1026 = vsel %vm1016, 1, 0
      %v1027 = vsel %vm1017, 1, 0
      %v1028 = vsel %vm1018, 1, 0
      %v1029 = vsel %vm1019, 1, 0
      %v1030 = vsel %vm1020, 1, 0
      %v1031 = vsel %vm1021, 1, 0
      %v1032 = vsel %vm1022, 1, 0
      %v1033 = vsel %vm1023, 1, 0
      %v1034 = vsel %vm1024, 1, 0
      %v1035 = vsel %vm1025, 1, 0
      %v1036 = vcvt.s32.f32 %v1026
      %v1037 = vcvt.s32.f32 %v1027
      %v1038 = vcvt.s32.f32 %v1028
      %v1039 = vcvt.s32.f32 %v1029
      %v1040 = vcvt.s32.f32 %v1030
      %v1041 = vcvt.s32.f32 %v1031
      %v1042 = vcvt.s32.f32 %v1032
      %v1043 = vcvt.s32.f32 %v1033
      %v1044 = vcvt.s32.f32 %v1034
      %v1045 = vcvt.s32.f32 %v1035
      %v1046 = vmul.f32 %v972, %v1036
      %v1047 = vmul.f32 %v974, %v1037
      %v1048 = vmul.f32 %v978, %v1038
      %v1049 = vmul.f32 %v980, %v1039
      %v1050 = vmul.f32 %v984, %v1040
      %v1051 = vmul.f32 %v986, %v1041
      %v1052 = vmul.f32 %v990, %v1042
      %v1053 = vmul.f32 %v992, %v1043
      %v1054 = vmul.f32 %v996, %v1044
      %v1055 = vmul.f32 %v998, %v1045
      %v1056 = vadd.f32 %v1046, %v1048
      %v1057 = vadd.f32 %v1056, %v1050
      %v1058 = vadd.f32 %v1057, %v1052
      %v1059 = vadd.f32 %v1058, %v1054
      %v1060 = vrot.slane %v1059, 4
      %v1061 = vadd.f32 %v1059, %v1060
      %v1062 = vrot.slane %v1061, 2
      %v1063 = vadd.f32 %v1061, %v1062
      %v1064 = vrot.slane %v1063, 1
      %v1065 = vadd.f32 %v1063, %v1064
      %v1066 = vadd.f32 %v1047, %v1049
      %v1067 = vadd.f32 %v1066, %v1051
      %v1068 = vadd.f32 %v1067, %v1053
      %v1069 = vadd.f32 %v1068, %v1055
      %v1070 = vrot.slane %v1069, 4
      %v1071 = vadd.f32 %v1069, %v1070
      %v1072 = vrot.slane %v1071, 2
      %v1073 = vadd.f32 %v1071, %v1072
      %v1074 = vrot.slane %v1073, 1
      %v1075 = vadd.f32 %v1073, %v1074
      %v1076 = vadd.f32 %v773, %v1065
      %v1077 = vadd.f32 %v774, %v1075
      %v1080 = vcombine.low %v1076, %v1077
      %v1082 = vunpack.c.l.s4 1966171168
      %v1083 = vunpack.c.0.s8 %v1082
      %v1084 = vlaneseq
      %v1085 = vshrl.u32 %v1084, 7
      %v1086 = vsub.s32 %v1083, %v1085
      %v1087 = vrot.slane %v1080, %v1086
      %v1089 = vunpack.c.l.s4 1966171168
      %v1090 = vunpack.c.0.s8 %v1089
      %v1091 = vlaneseq
      %v1092 = vshrl.u32 %v1091, 7
      %v1093 = vsub.s32 %v1090, %v1092
      %v1094 = vrot.slane %v1087, %v1093
      %v1096 = vlaneseq
      %vm1097 = vcmp.ge.s32.totalorder %v1096, 0
      %vm1098 = vcmp.lt.s32.totalorder %v1096, 256
      %vm1099 = vmand %vm1097, %vm1098
      %1100 = vst.msk [vmem:[%s143] sm:$0x3] %vm1099, %v1094
      %s1101 = smul.u32 2, %s13
      %p1102 = scmp.lt.s32.totalorder %s1101, 3
      %s1103 = scalar_select %p1102, %s1101, 3
      %s1104 = scalar_lea.vmem %s2, %s1103
      // Predicated region
      $region29: #{dense_grid_forward.1} parent=27 // pred_check
        %p1105 = pneg %p78
      $region30: #{dense_grid_forward.1} parent=27 // pred_check_branch
        %1107 = sbr.rel (%p1105) target = $region32
      $region31: #{dense_grid_forward.1} parent=27 // pred_region
        %s1108 = smul.u32 2, %s13
      $region32: #{dense_grid_forward.1} parent=27 // pred_fallthru
        _
    $region28: #{dense_grid_forward.1} parent=5 // pred_fallthru
      _
    %p1109 = scmp.le.s32.totalorder 2, %s8
    // Predicated region
    $region33: #{dense_grid_forward.1} parent=5 // pred_check
      %p1110 = pneg %p1109
    $region34: #{dense_grid_forward.1} parent=5 // pred_check_branch
      %1112 = sbr.rel (%p1110) target = $region36
    $region35: #{dense_grid_forward.1} parent=5 // pred_region
      %s1113 = ssub.s32 %s8, 2
      // Predicated region
      $region37: #{dense_grid_forward.1} parent=35 // pred_check
        %p1114 = pneg %p84
      $region38: #{dense_grid_forward.1} parent=35 // pred_check_branch
        %1116 = sbr.rel (%p1114) target = $region40
      $region39: #{dense_grid_forward.1} parent=35 // pred_region
        %s1117 = smul.u32 2, %s14
        %p1118 = scmp.lt.s32.totalorder %s1117, 3
        %s1119 = scalar_select %p1118, %s1117, 3
        %s1120 = scalar_lea.vmem %s2, %s1119
      $region40: #{dense_grid_forward.1} parent=35 // pred_fallthru
        _
    $region36: #{dense_grid_forward.1} parent=5 // pred_fallthru
      _
  $region6: #{dense_grid_forward.1} parent=0 // loop_footer
    %s12 = sadd.s32 1, %s8
  $region7: #{dense_grid_forward.1} parent=0 // loop_footer_branch
    %7 = sbr.rel target = $region3
  $region8: #{dense_grid_forward.1} parent=0 // loop_exit
    _

</llo_original>
